<compile_context>
chip_gen: v6e
topology: v6e:2x2x1
jax: 0.10.0
libtpu: 0.0.40
codegen_flags: <defaults>
</compile_context>

<pallas_src>
import jax
import jax.numpy as jnp
from jax import lax
from jax.experimental import pallas as pl
from jax.experimental.pallas import tpu as pltpu


def _selector_kernel(u_ref, x_ref, out_ref):
    """One batch tile: greedy argmax, categorical sample, log-prob, entropy.

    Results are packed into a single lane-dense (TB, 128) f32 output slab so
    the kernel issues one unmasked store / one output DMA stream instead of
    four masked sub-lane-width ones.
    """
    p = x_ref[...]                       # (TB, A) f32 probabilities
    TB, A = p.shape
    u = u_ref[...]                       # (TB, 1) uniforms in [0, 1)

    col = lax.broadcasted_iota(jnp.int32, (TB, A), 1)

    # ---- greedy argmax over actions (first maximal index, like torch .max(1)) ----
    rowmax = jnp.max(p, axis=1, keepdims=True)                          # (TB, 1)
    greedy = jnp.min(jnp.where(p == rowmax, col, A), axis=1, keepdims=True)
    greedy = jnp.minimum(greedy, A - 1)                                 # NaN-row guard

    # ---- inclusive prefix sum along lanes: log2(A) shift+add steps ----
    # (replaces the old (A, A) triangular f32 matmul: no A^2 VMEM, no MXU)
    csum = p
    shift = 1
    while shift < A:
        shifted = jnp.concatenate(
            [jnp.zeros((TB, shift), p.dtype), csum[:, :A - shift]], axis=1)
        csum = csum + shifted
        shift *= 2
    total = csum[:, A - 1:A]                                            # (TB, 1)

    # ---- inverse-CDF categorical sample, one uniform per row ----
    thresh = u * total
    samp = jnp.sum((csum <= thresh).astype(jnp.int32), axis=1, keepdims=True)
    samp = jnp.minimum(samp, A - 1)

    # ---- log-prob of the sampled action (Categorical normalizes its probs) ----
    onehot = (col == samp).astype(jnp.float32)
    p_a = jnp.sum(p * onehot, axis=1, keepdims=True)
    log_g = jnp.log(p_a / total)                # fused: one EUP log instead of two

    # ---- per-row entropy partial: -sum_a (p + 1e-8) * log(p + 1e-8) ----
    pe = p + 1e-8
    ent_row = -jnp.sum(pe * jnp.log(pe), axis=1, keepdims=True)

    # ---- pack everything into one lane-dense slab (cols 0..3 used) ----
    lane = lax.broadcasted_iota(jnp.int32, (TB, 128), 1)
    out = jnp.zeros((TB, 128), jnp.float32)
    out = jnp.where(lane == 0, samp.astype(jnp.float32), out)
    out = jnp.where(lane == 1, greedy.astype(jnp.float32), out)
    out = jnp.where(lane == 2, log_g, out)
    out = jnp.where(lane == 3, ent_row, out)
    out_ref[...] = out


def _choose_batch_tile(B, A):
    # Keep the double-buffered per-tile footprint (x + u + packed out) well
    # under the v7x scoped-VMEM budget; v5e/v6e have more headroom.
    budget = 24 * 1024 * 1024
    per_row_bytes = 2 * 4 * (A + 1 + 128)        # 2x for double buffering
    cap = max(8, budget // per_row_bytes)
    if B <= cap:
        return B                                 # whole batch in one block
    tb = 1024
    while tb >= 8:
        if tb <= cap and B % tb == 0:
            return tb
        tb //= 2
    return B                                     # fallback: single (large) block


@jax.jit
def _selector_call(x, u):
    B, A = x.shape
    TB = _choose_batch_tile(B, A)
    grid = (B // TB,)
    return pl.pallas_call(
        _selector_kernel,
        out_shape=jax.ShapeDtypeStruct((B, 128), jnp.float32),
        grid=grid,
        in_specs=[
            pl.BlockSpec((TB, 1), lambda i: (i, 0)),       # per-row uniforms
            pl.BlockSpec((TB, A), lambda i: (i, 0)),       # probabilities
        ],
        out_specs=pl.BlockSpec((TB, 128), lambda i: (i, 0)),
        compiler_params=pltpu.CompilerParams(
            dimension_semantics=("parallel",)),            # megacore on v7x
    )(u, x)


def stochastic_actions_selector_basic(x, global_idxes, rng_key, testing=False):
    """JAX/Pallas port of StochasticActionsSelectorBasic.forward.

    `rng_key` replaces torch's global RNG for Categorical.sample().
    """
    batch_size = x.shape[0]
    # Only one uniform per row is consumed (inverse-CDF sampling), so generate
    # exactly (B, 1) of randomness.
    u = jax.random.uniform(rng_key, (batch_size, 1), dtype=jnp.float32)

    packed = _selector_call(x, u)
    sampled = packed[:, 0].astype(jnp.int32)           # (B,)  categorical sample
    res_greedy = packed[:, 1:2].astype(jnp.int32)      # (B,1) argmax, like .max(1).view(-1,1)
    log_g_all = packed[:, 2]                           # (B,)
    entropy = jnp.sum(packed[:, 3])                    # sum of per-row partials

    action_probs = x
    if testing:
        a = res_greedy                                 # (B, 1), matches torch testing path
        log_g = None
    else:
        a = sampled                                    # (B,), like Categorical.sample()
        log_g = log_g_all

    # NOTE: faithfully reproduces the PyTorch broadcast: (B,1) == (B,) -> (B,B)
    # in the non-testing path (same numpy-style broadcasting rules as torch).
    matches_argmax = (res_greedy == a)
    matches_argmax_count = jnp.sum(matches_argmax.astype(jnp.int32))

    return {
        'action_probs': action_probs,
        'actions': a,   # TODO(synk): torch's .cpu() host transfer has no Pallas equivalent
        'entropy': entropy,
        'log_g': log_g,
        'global_idxes': global_idxes,
        'matches_argmax_count': matches_argmax_count,
        'stochastic_draws_count': batch_size,
    }


if __name__ == "__main__":
    key = jax.random.PRNGKey(0)
    data_key, sample_key = jax.random.split(key)
    B, A = 8, 16
    logits = jax.random.normal(data_key, (B, A), dtype=jnp.float32)
    x = jax.nn.softmax(logits, axis=1)        # module expects pre-softmaxed probabilities
    global_idxes = jnp.arange(B, dtype=jnp.int32)

    res = stochastic_actions_selector_basic(x, global_idxes, sample_key, testing=False)
    jax.block_until_ready((res['actions'], res['entropy'], res['log_g'],
                           res['matches_argmax_count']))

    # light sanity checks
    assert res['actions'].shape == (B,)
    assert bool(jnp.all((res['actions'] >= 0) & (res['actions'] < A)))
    assert bool(jnp.all(jnp.isfinite(res['log_g'])))
    assert bool(jnp.isfinite(res['entropy']))
    assert int(res['stochastic_draws_count']) == B

    # cross-check entropy against a pure-JAX reference
    pe = x + 1e-8
    ent_ref = -jnp.sum(pe * jnp.log(pe))
    assert bool(jnp.allclose(res['entropy'], ent_ref, rtol=1e-4, atol=1e-4))

    # also exercise the testing=True path (greedy actions)
    res_t = stochastic_actions_selector_basic(x, global_idxes, sample_key, testing=True)
    jax.block_until_ready(res_t['actions'])
    assert res_t['actions'].shape == (B, 1)
    greedy_ref = jnp.argmax(x, axis=1).reshape(-1, 1).astype(jnp.int32)
    assert bool(jnp.all(res_t['actions'] == greedy_ref))
    assert int(res_t['matches_argmax_count']) == B

    print("KERNEL_OK")
</pallas_src>

<mosaic_0001>
module attributes {stable_mosaic.version = 11 : i64} {
  func.func @_selector_kernel(%arg0: i32, %arg1: memref<8x1xf32, #tpu.memory_space<vmem>>, %arg2: memref<8x16xf32, #tpu.memory_space<vmem>>, %arg3: memref<8x128xf32, #tpu.memory_space<vmem>>) attributes {dimension_semantics = [#tpu.dimension_semantics<parallel>], iteration_bounds = array<i64: 1>, scalar_prefetch = 0 : i64, scratch_operands = 0 : i64, tpu.core_type = #tpu.core_type<tc>, window_params = [{transform_indices = @transform_0, window_bounds = array<i64: 8, 1>}, {transform_indices = @transform_1, window_bounds = array<i64: 8, 16>}, {transform_indices = @transform_2, window_bounds = array<i64: 8, 128>}]} {
    %c0 = arith.constant 0 : index
    %c0_0 = arith.constant 0 : index
    %0 = vector.load %arg2[%c0, %c0_0] : memref<8x16xf32, #tpu.memory_space<vmem>>, vector<8x16xf32>
    %c0_1 = arith.constant 0 : index
    %c0_2 = arith.constant 0 : index
    %1 = vector.load %arg1[%c0_1, %c0_2] : memref<8x1xf32, #tpu.memory_space<vmem>>, vector<8x1xf32>
    %2 = tpu.iota {dimensions = array<i32: 1>} : vector<8x16xi32>
    %cst = arith.constant dense<0xFF800000> : vector<8xf32>
    %3 = vector.multi_reduction <maximumf>, %0, %cst [1] : vector<8x16xf32> to vector<8xf32>
    %4 = vector.shape_cast %3 : vector<8xf32> to vector<8x1xf32>
    %5 = vector.broadcast %4 : vector<8x1xf32> to vector<8x16xf32>
    %6 = arith.cmpf oeq, %0, %5 : vector<8x16xf32>
    %c16_i32 = arith.constant 16 : i32
    %7 = vector.broadcast %c16_i32 : i32 to vector<8x16xi32>
    %8 = arith.select %6, %2, %7 : vector<8x16xi1>, vector<8x16xi32>
    %cst_3 = arith.constant dense<2147483647> : vector<8xi32>
    %9 = vector.multi_reduction <minsi>, %8, %cst_3 [1] : vector<8x16xi32> to vector<8xi32>
    %10 = vector.shape_cast %9 : vector<8xi32> to vector<8x1xi32>
    %c15_i32 = arith.constant 15 : i32
    %11 = vector.broadcast %c15_i32 : i32 to vector<8x1xi32>
    %12 = arith.minsi %10, %11 : vector<8x1xi32>
    %cst_4 = arith.constant 0.000000e+00 : f32
    %13 = vector.broadcast %cst_4 : f32 to vector<8x1xf32>
    %14 = vector.extract_strided_slice %0 {offsets = [0, 0], sizes = [8, 15], strides = [1, 1]} : vector<8x16xf32> to vector<8x15xf32>
    %15 = tpu.concatenate %13, %14 in 1 : vector<8x1xf32>, vector<8x15xf32> -> vector<8x16xf32>
    %16 = arith.addf %0, %15 : vector<8x16xf32>
    %cst_5 = arith.constant 0.000000e+00 : f32
    %17 = vector.broadcast %cst_5 : f32 to vector<8x2xf32>
    %18 = vector.extract_strided_slice %16 {offsets = [0, 0], sizes = [8, 14], strides = [1, 1]} : vector<8x16xf32> to vector<8x14xf32>
    %19 = tpu.concatenate %17, %18 in 1 : vector<8x2xf32>, vector<8x14xf32> -> vector<8x16xf32>
    %20 = arith.addf %16, %19 : vector<8x16xf32>
    %cst_6 = arith.constant 0.000000e+00 : f32
    %21 = vector.broadcast %cst_6 : f32 to vector<8x4xf32>
    %22 = vector.extract_strided_slice %20 {offsets = [0, 0], sizes = [8, 12], strides = [1, 1]} : vector<8x16xf32> to vector<8x12xf32>
    %23 = tpu.concatenate %21, %22 in 1 : vector<8x4xf32>, vector<8x12xf32> -> vector<8x16xf32>
    %24 = arith.addf %20, %23 : vector<8x16xf32>
    %cst_7 = arith.constant 0.000000e+00 : f32
    %25 = vector.broadcast %cst_7 : f32 to vector<8x8xf32>
    %26 = vector.extract_strided_slice %24 {offsets = [0, 0], sizes = [8, 8], strides = [1, 1]} : vector<8x16xf32> to vector<8x8xf32>
    %27 = tpu.concatenate %25, %26 in 1 : vector<8x8xf32>, vector<8x8xf32> -> vector<8x16xf32>
    %28 = arith.addf %24, %27 : vector<8x16xf32>
    %29 = vector.extract_strided_slice %28 {offsets = [0, 15], sizes = [8, 1], strides = [1, 1]} : vector<8x16xf32> to vector<8x1xf32>
    %30 = arith.mulf %1, %29 : vector<8x1xf32>
    %31 = vector.broadcast %30 : vector<8x1xf32> to vector<8x16xf32>
    %32 = arith.cmpf ole, %28, %31 : vector<8x16xf32>
    %33 = arith.extui %32 : vector<8x16xi1> to vector<8x16xi32>
    %cst_8 = arith.constant dense<0> : vector<8xi32>
    %34 = vector.multi_reduction <add>, %33, %cst_8 [1] : vector<8x16xi32> to vector<8xi32>
    %35 = vector.shape_cast %34 : vector<8xi32> to vector<8x1xi32>
    %c15_i32_9 = arith.constant 15 : i32
    %36 = vector.broadcast %c15_i32_9 : i32 to vector<8x1xi32>
    %37 = arith.minsi %35, %36 : vector<8x1xi32>
    %38 = vector.broadcast %37 : vector<8x1xi32> to vector<8x16xi32>
    %39 = arith.cmpi eq, %2, %38 : vector<8x16xi32>
    %40 = arith.extui %39 : vector<8x16xi1> to vector<8x16xi32>
    %41 = arith.sitofp %40 : vector<8x16xi32> to vector<8x16xf32>
    %42 = arith.mulf %0, %41 : vector<8x16xf32>
    %cst_10 = arith.constant dense<0.000000e+00> : vector<8xf32>
    %43 = vector.multi_reduction <add>, %42, %cst_10 [1] : vector<8x16xf32> to vector<8xf32>
    %44 = vector.shape_cast %43 : vector<8xf32> to vector<8x1xf32>
    %45 = arith.divf %44, %29 : vector<8x1xf32>
    %46 = math.log %45 : vector<8x1xf32>
    %cst_11 = arith.constant 9.99999993E-9 : f32
    %47 = vector.broadcast %cst_11 : f32 to vector<8x16xf32>
    %48 = arith.addf %0, %47 : vector<8x16xf32>
    %49 = math.log %48 : vector<8x16xf32>
    %50 = arith.mulf %48, %49 : vector<8x16xf32>
    %cst_12 = arith.constant dense<0.000000e+00> : vector<8xf32>
    %51 = vector.multi_reduction <add>, %50, %cst_12 [1] : vector<8x16xf32> to vector<8xf32>
    %52 = vector.shape_cast %51 : vector<8xf32> to vector<8x1xf32>
    %cst_13 = arith.constant 0.000000e+00 : f32
    %53 = vector.broadcast %cst_13 : f32 to vector<8x1xf32>
    %54 = arith.subf %53, %52 : vector<8x1xf32>
    %55 = tpu.iota {dimensions = array<i32: 1>} : vector<8x128xi32>
    %cst_14 = arith.constant 0.000000e+00 : f32
    %56 = vector.broadcast %cst_14 : f32 to vector<8x128xf32>
    %c0_i32 = arith.constant 0 : i32
    %57 = vector.broadcast %c0_i32 : i32 to vector<8x128xi32>
    %58 = arith.cmpi eq, %55, %57 : vector<8x128xi32>
    %59 = arith.sitofp %37 : vector<8x1xi32> to vector<8x1xf32>
    %60 = vector.shape_cast %59 : vector<8x1xf32> to vector<8x1xf32>
    %61 = vector.broadcast %60 : vector<8x1xf32> to vector<8x128xf32>
    %62 = arith.select %58, %61, %56 : vector<8x128xi1>, vector<8x128xf32>
    %c1_i32 = arith.constant 1 : i32
    %63 = vector.broadcast %c1_i32 : i32 to vector<8x128xi32>
    %64 = arith.cmpi eq, %55, %63 : vector<8x128xi32>
    %65 = arith.sitofp %12 : vector<8x1xi32> to vector<8x1xf32>
    %66 = vector.shape_cast %65 : vector<8x1xf32> to vector<8x1xf32>
    %67 = vector.broadcast %66 : vector<8x1xf32> to vector<8x128xf32>
    %68 = arith.select %64, %67, %62 : vector<8x128xi1>, vector<8x128xf32>
    %c2_i32 = arith.constant 2 : i32
    %69 = vector.broadcast %c2_i32 : i32 to vector<8x128xi32>
    %70 = arith.cmpi eq, %55, %69 : vector<8x128xi32>
    %71 = vector.shape_cast %46 : vector<8x1xf32> to vector<8x1xf32>
    %72 = vector.broadcast %71 : vector<8x1xf32> to vector<8x128xf32>
    %73 = arith.select %70, %72, %68 : vector<8x128xi1>, vector<8x128xf32>
    %c3_i32 = arith.constant 3 : i32
    %74 = vector.broadcast %c3_i32 : i32 to vector<8x128xi32>
    %75 = arith.cmpi eq, %55, %74 : vector<8x128xi32>
    %76 = vector.shape_cast %54 : vector<8x1xf32> to vector<8x1xf32>
    %77 = vector.broadcast %76 : vector<8x1xf32> to vector<8x128xf32>
    %78 = arith.select %75, %77, %73 : vector<8x128xi1>, vector<8x128xf32>
    %c0_15 = arith.constant 0 : index
    %c0_16 = arith.constant 0 : index
    %79 = vector.load %arg3[%c0_15, %c0_16] : memref<8x128xf32, #tpu.memory_space<vmem>>, vector<8x128xf32>
    tpu.vector_store %arg3[%c0_15, %c0_16], %78 {strides = array<i32>} : memref<8x128xf32, #tpu.memory_space<vmem>>, vector<8x128xf32>,
    return
  }
  func.func @transform_0(%arg0: i32) -> (i32, i32) {
    %c0_i32 = arith.constant 0 : i32
    %c0_i32_0 = arith.constant 0 : i32
    return %arg0, %c0_i32 : i32, i32
  }
  func.func @transform_1(%arg0: i32) -> (i32, i32) {
    %c0_i32 = arith.constant 0 : i32
    %c0_i32_0 = arith.constant 0 : i32
    return %arg0, %c0_i32 : i32, i32
  }
  func.func @transform_2(%arg0: i32) -> (i32, i32) {
    %c0_i32 = arith.constant 0 : i32
    %c0_i32_0 = arith.constant 0 : i32
    return %arg0, %c0_i32 : i32, i32
  }
}

</mosaic_0001>

<llo_original>
// kernel: _selector_call.1
$region0: #{_selector_call.1}
  #allocation0 [shape = 'u32[]', space=smem, size = 0x4, offset = 0x4, fixed_abs, tag = 'smem constant byte address 0x4 - core index']
  #allocation1 [shape = 'u32[144,128]{1,0:T(1,128)}', space=vmem, size = 0x12000, scoped, tag = 'internal scratch']
  %s0 = inlined_call_operand.vmem [shape: f32[8,1], index: 0, kind: input, shape index: {}]
  %s1 = inlined_call_operand.vmem [shape: f32[8,16], index: 1, kind: input, shape index: {}]
  %s2 = inlined_call_operand.hbm [shape: f32[8,128], index: 2, kind: output, shape index: {}]
  %s3 = sld [smem:[#allocation0]]
  $region18: #{_selector_call.1} parent=0
    _
  %s5 = ssub.s32 1, %s3
  %s6 = scalar_select 0, %s5, %s3
  $region1: #{_selector_call.1} parent=0
    #allocation2 [shape = 'u8[4096]{0}', space=vmem, size = 0x1000, scoped, tag = 'output window, operand 0, single buffered']
    #allocation3 [shape = 's32[1]{0}', space=sflag, size = 0x4, scoped, tag = 'scoped memory for _selector_call.1']
    %7 = vsyncpa [#allocation3], 0
    // Predicated region
    $region2: #{_selector_call.1} parent=1 // pred_check
      _
    $region3: #{_selector_call.1} parent=1 // pred_check_branch
      %9 = sbr.rel (0) target = $region5
    $region4: #{_selector_call.1} parent=1 // pred_region
      _
    $region5: #{_selector_call.1} parent=1 // pred_fallthru
      _
    // Predicated region
    $region6: #{_selector_call.1} parent=1 // pred_check
      _
    $region7: #{_selector_call.1} parent=1 // pred_check_branch
      %11 = sbr.rel (0) target = $region9
    $region8: #{_selector_call.1} parent=1 // pred_region
      _
    $region9: #{_selector_call.1} parent=1 // pred_fallthru
      _
    %v12 = vld [vmem:[%s1] sm:$0xff]
    %v13 = vld [vmem:[%s0] sm:$0xff]
    %v14 = vlaneseq
    %v15 = vand.u32 %v14, 127
    %vm16 = vcmask 130048
    %v17 = vsel %vm16, %v12, -inf
    %18 = vmax.xlane.f32.xlu0 %v17
    %v19 = vpop.xlane.xlu0 %18
    %vm20 = vcmp.eq.f32.partialorder %v12, %v19
    %v21 = vsel %vm20, %v15, 16
    %v22 = vsel %vm16, %v21, 2147483647
    %v23 = vand.u32 %v22, 65535
    %v24 = vshra.s32 %v22, 16
    %v25 = vcvt.s32.f32 %v23
    %v26 = vcvt.s32.f32 %v24
    %27 = vmin.xlane.f32.xlu0 %v26
    %v28 = vpop.xlane.xlu0 %27
    %vm29 = vcmp.eq.f32.partialorder %v26, %v28
    %v30 = vsel %vm29, %v25, inf
    %31 = vmin.xlane.f32.xlu0 %v30
    %v32 = vpop.xlane.xlu0 %31
    %v33 = vcvt.f32.s32 %v32
    %v34 = vcvt.f32.s32 %v28
    %v35 = vshll.u32 %v34, 16
    %v36 = vadd.s32 %v35, %v33
    %vm37 = vcmp.lt.s32.totalorder %v36, 15
    %v38 = vsel %vm37, %v36, 15
    %40 = vrot.lane.b32.xlu0 %v12, 1
    %v41 = vpop.permute.xlu0 %40
    %vm43 = vcmask 7168
    %v44 = vsel %vm43, 0.0, %v41
    %v45 = vadd.f32 %v12, %v44
    %47 = vrot.lane.b32.xlu0 %v45, 2
    %v48 = vpop.permute.xlu0 %47
    %vm50 = vcmask 15360
    %v51 = vsel %vm50, 0.0, %v48
    %v52 = vadd.f32 %v45, %v51
    %54 = vrot.lane.b32.xlu0 %v52, 4
    %v55 = vpop.permute.xlu0 %54
    %vm57 = vcmask 31744
    %v58 = vsel %vm57, 0.0, %v55
    %v59 = vadd.f32 %v52, %v58
    %61 = vrot.lane.b32.xlu0 %v59, 8
    %v62 = vpop.permute.xlu0 %61
    %vm64 = vcmask 64512
    %v65 = vsel %vm64, 0.0, %v62
    %v66 = vadd.f32 %v59, %v65
    %68 = vrot.lane.b32.xlu0 %v66, 113
    %v69 = vpop.permute.xlu0 %68
    %v71 = vmul.f32 %v13, %v69
    %73 = vset.pattern.permute.xlu0 0
    %74 = vperm.xlu0 %73, %v71
    %v75 = vpop.permute.xlu0 %74
    %vm77 = vcmp.le.f32.partialorder %v66, %v75
    %v78 = vsel %vm77, 1, 0
    %v79 = vsel %vm16, %v78, 0
    %v80 = vand.u32 %v79, 65535
    %v81 = vshrl.u32 %v79, 16
    %v82 = vcvt.s32.f32 %v80
    %v83 = vcvt.s32.f32 %v81
    %84 = vadd.xlane.f32.xlu0 %v82
    %v85 = vpop.xlane.xlu0 %84
    %86 = vadd.xlane.f32.xlu0 %v83
    %v87 = vpop.xlane.xlu0 %86
    %v88 = vcvt.f32.s32 %v85
    %v89 = vcvt.f32.s32 %v87
    %v90 = vshll.u32 %v89, 16
    %v91 = vadd.s32 %v90, %v88
    %vm92 = vcmp.lt.s32.totalorder %v91, 15
    %v93 = vsel %vm92, %v91, 15
    %vm94 = vcmp.eq.s32.totalorder %v15, %v93
    %v95 = vsel %vm94, 1, 0
    %v96 = vcvt.s32.f32 %v95
    %v97 = vmul.f32 %v12, %v96
    %v98 = vsel %vm16, %v97, 0.0
    %99 = vadd.xlane.f32.xlu0 %v98
    %v100 = vpop.xlane.xlu0 %99
    %v101 = vrcp.pop %v66
    %v102 = vmul.f32 %v100, %v101
    %v103 = vlog2.pop %v102
    %v104 = vmul.f32 %v103, 0.6931472
    %v105 = vadd.f32 %v12, 1e-08
    %v106 = vlog2.pop %v105
    %v107 = vmul.f32 %v106, 0.6931472
    %v108 = vmul.f32 %v105, %v107
    %v109 = vsel %vm16, %v108, 0.0
    %110 = vadd.xlane.f32.xlu0 %v109
    %v111 = vpop.xlane.xlu0 %110
    %v112 = vsub.f32 0.0, %v111
    %vm113 = vcmp.eq.s32.totalorder %v15, 0
    %v114 = vcvt.s32.f32 %v93
    %v115 = vsel %vm113, %v114, 0.0
    %vm116 = vcmp.eq.s32.totalorder %v15, 1
    %v117 = vcvt.s32.f32 %v38
    %v118 = vsel %vm116, %v117, %v115
    %vm119 = vcmp.eq.s32.totalorder %v15, 2
    %121 = vset.pattern.permute.xlu0 15
    %122 = vperm.xlu0 %121, %v104
    %v123 = vpop.permute.xlu0 %122
    %v125 = vsel %vm119, %v123, %v118
    %vm126 = vcmp.eq.s32.totalorder %v15, 3
    %v127 = vsel %vm126, %v112, %v125
    %128 = vst [vmem:[#allocation2] sm:$0xff] %v127
    // Predicated region
    $region10: #{_selector_call.1} parent=1 // pred_check
      _
    $region11: #{_selector_call.1} parent=1 // pred_check_branch
      %130 = sbr.rel (0) target = $region13
    $region12: #{_selector_call.1} parent=1 // pred_region
      %s132 = ssub.s32 128, 128
      %133 = vsyncadd [#allocation3], %s132
      %s135 = sshll.u32 [#allocation2], 4
      %s136 = int_to_ptr.vmem [resolvable:$true] %s135
      %138 = dma.vmem_to_hbm [thread:$0]  %s136, 128, %s2, [#allocation3]
    $region13: #{_selector_call.1} parent=1 // pred_fallthru
      _
    // Predicated region
    $region14: #{_selector_call.1} parent=1 // pred_check
      _
    $region15: #{_selector_call.1} parent=1 // pred_check_branch
      %140 = sbr.rel (0) target = $region17
    $region16: #{_selector_call.1} parent=1 // pred_region
      %141 = dma.done [#allocation3], 128
    $region17: #{_selector_call.1} parent=1 // pred_fallthru
      _
    %142 = vsyncpa [#allocation3], 1

</llo_original>
